<compile_context>
chip_gen: v7x
topology: tpu7x:2x2x1
jax: 0.10.0
libtpu: 0.0.40
codegen_flags: <defaults>
</compile_context>

<pallas_src>
import functools

import jax
import jax.numpy as jnp
from jax.experimental import pallas as pl
from jax.experimental.pallas import tpu as pltpu

_LANE = 128


def _cdiv(a: int, b: int) -> int:
    return -(-a // b)


def _round_up(x: int, m: int) -> int:
    return _cdiv(x, m) * m


def _tpu_defaults():
    """Returns (target_tile_bytes, vmem_limit_bytes, num_tensorcores) for this chip."""
    tile_bytes, vmem_limit, n_tc = 2 << 20, 32 << 20, 1          # conservative default
    try:
        kind = jax.devices()[0].device_kind.lower()
    except Exception:
        kind = ""
    if "v7" in kind:
        # ~3.2 TB/s HBM per TC: bigger tiles amortize the ~0.35us/step overhead.
        # 8 MiB tiles double-buffered (in+out) = 32 MiB, under the 64 MiB VMEM.
        tile_bytes, vmem_limit, n_tc = 8 << 20, 48 << 20, 2
    elif "v6" in kind:
        tile_bytes, vmem_limit, n_tc = 4 << 20, 32 << 20, 1
    elif "v5" in kind:
        # ~820 GB/s HBM: 2 MiB tiles are already >90% amortized; 16 MiB scoped VMEM.
        tile_bytes, vmem_limit, n_tc = 2 << 20, 16 << 20, 1
    return tile_bytes, vmem_limit, n_tc


def _smooth_step_kernel(x_ref, o_ref, *, lower, upper, a3, a1, a0, compute_dtype):
    x = x_ref[...].astype(compute_dtype)
    poly = x * (a1 + a3 * x * x) + a0                      # Horner form: 3 mul + 2 add
    y = jnp.where(x <= lower, 0.0, jnp.where(x >= upper, 1.0, poly))
    o_ref[...] = y.astype(o_ref.dtype)


def smooth_step(x, gamma: float = 1.0):
    """Applies the smooth-step nonlinearity elementwise via a Pallas TPU kernel."""
    lower = -gamma / 2.0
    upper = gamma / 2.0
    a3 = -2.0 / gamma ** 3
    a1 = 3.0 / (2.0 * gamma)
    a0 = 0.5

    orig_shape = x.shape
    dtype = x.dtype
    n = x.size
    if n == 0:
        return x

    itemsize = jnp.dtype(dtype).itemsize
    # Sub-32-bit inputs are computed in f32 (more accurate than the reference, cast
    # back on store); >=32-bit inputs keep their own precision.
    compute_dtype = jnp.float32 if itemsize < 4 else dtype

    tile_bytes, vmem_limit, n_tc = _tpu_defaults()
    min_steps = 4 if n_tc >= 2 else 1          # >=2 pipelined steps per TC on v7x only

    kernel = functools.partial(
        _smooth_step_kernel,
        lower=lower, upper=upper, a3=a3, a1=a1, a0=a0, compute_dtype=compute_dtype,
    )
    compiler_params = pltpu.CompilerParams(
        dimension_semantics=("parallel",),
        vmem_limit_bytes=vmem_limit,
    )
    # NOTE: if callers donate `x` at the jit boundary, input_output_aliases={0: 0}
    # on the pallas_call below would let XLA reuse the input HBM buffer in place.

    flat = jnp.reshape(x, (n,))                # contiguous row-major: free reshape

    if n % _LANE == 0:
        # Lane-dense 2-D slab (free reshape): widest last dim that divides n.
        width = max(w for w in (1024, 512, 256, _LANE) if n % w == 0)
        rows = n // width
        slab = jnp.reshape(flat, (rows, width))

        sub = max(8, 32 // itemsize)           # native sublane rows: f32 8, bf16 16, i8 32
        tile_rows = max(sub, (tile_bytes // (width * itemsize)) // sub * sub)
        if _cdiv(rows, tile_rows) < min_steps:     # give v7x's 2 TCs >=2 steps each
            tile_rows = max(sub, _round_up(_cdiv(rows, min_steps), sub))
        tile_rows = min(tile_rows, rows)           # block <= array (or == full dim)
        num_blocks = _cdiv(rows, tile_rows)        # ragged last block handled by Pallas

        out = pl.pallas_call(
            kernel,
            out_shape=jax.ShapeDtypeStruct((rows, width), dtype),
            grid_spec=pl.GridSpec(
                grid=(num_blocks,),
                in_specs=[pl.BlockSpec((tile_rows, width), lambda i: (i, 0))],
                out_specs=pl.BlockSpec((tile_rows, width), lambda i: (i, 0)),
            ),
            compiler_params=compiler_params,
        )(slab)
    else:
        # Ragged element count: run directly on the flat 1-D array.  Pallas pads the
        # ragged last block on read and clips it on write, so there is NO jnp.pad /
        # output-slice copy of the tensor (ideal 2N bytes of HBM traffic).
        gran = max(8, 32 // itemsize) * _LANE      # one native (sublane, lane) tile
        block = max(gran, (tile_bytes // itemsize) // gran * gran)
        if _cdiv(n, block) < min_steps:
            block = max(gran, _round_up(_cdiv(n, min_steps), gran))
        block = min(block, n)
        num_blocks = _cdiv(n, block)

        out = pl.pallas_call(
            kernel,
            out_shape=jax.ShapeDtypeStruct((n,), dtype),
            grid_spec=pl.GridSpec(
                grid=(num_blocks,),
                in_specs=[pl.BlockSpec((block,), lambda i: (i,))],
                out_specs=pl.BlockSpec((block,), lambda i: (i,)),
            ),
            compiler_params=compiler_params,
        )(flat)

    return jnp.reshape(out, orig_shape)


def smooth_step_reference(x, gamma: float = 1.0):
    """Pure-JAX reference, mirrors the PyTorch forward exactly."""
    lower = -gamma / 2.0
    upper = gamma / 2.0
    a3 = -2.0 / gamma ** 3
    a1 = 3.0 / (2.0 * gamma)
    a0 = 0.5
    return jnp.where(
        x <= lower,
        jnp.zeros_like(x),
        jnp.where(x >= upper, jnp.ones_like(x), a3 * x ** 3 + a1 * x + a0),
    )


if __name__ == "__main__":
    key = jax.random.PRNGKey(0)

    # NCHW-like activation tensor; values span all three branches.  n % 128 == 0
    # -> lane-dense 2-D path, no padding, no copies.
    x = jax.random.normal(key, (2, 4, 16, 16), dtype=jnp.float32) * 1.5
    y = jax.block_until_ready(smooth_step(x, gamma=1.0))
    y_ref = smooth_step_reference(x, gamma=1.0)
    assert y.shape == x.shape and y.dtype == x.dtype
    assert jnp.allclose(y, y_ref, atol=1e-6, rtol=1e-6), "mismatch vs reference"

    # Ragged element count (3*5*7*11 = 1155) -> copy-free 1-D path with a clipped
    # last block.
    x2 = jax.random.normal(jax.random.PRNGKey(1), (3, 5, 7, 11), dtype=jnp.float32) * 2.0
    y2 = jax.block_until_ready(smooth_step(x2, gamma=1.0))
    y2_ref = smooth_step_reference(x2, gamma=1.0)
    assert y2.shape == x2.shape and y2.dtype == x2.dtype
    assert jnp.allclose(y2, y2_ref, atol=1e-6, rtol=1e-6), "mismatch vs reference (ragged)"

    # bf16 path: kernel computes in f32 and casts back, so compare against an f32
    # reference with bf16-level tolerance.
    x3 = (jax.random.normal(jax.random.PRNGKey(2), (2, 4, 16, 16)) * 1.5).astype(jnp.bfloat16)
    y3 = jax.block_until_ready(smooth_step(x3, gamma=1.0))
    y3_ref = smooth_step_reference(x3.astype(jnp.float32), gamma=1.0)
    assert y3.shape == x3.shape and y3.dtype == x3.dtype
    assert jnp.allclose(y3.astype(jnp.float32), y3_ref, atol=1e-2, rtol=1e-2), "mismatch (bf16)"

    print("KERNEL_OK")
</pallas_src>

<mosaic_0001>
module attributes {stable_mosaic.version = 11 : i64} {
  func.func @_smooth_step_kernel(%arg0: i32, %arg1: memref<2x1024xf32, #tpu.memory_space<vmem>>, %arg2: memref<2x1024xf32, #tpu.memory_space<vmem>>) attributes {dimension_semantics = [#tpu.dimension_semantics<parallel>], iteration_bounds = array<i64: 1>, scalar_prefetch = 0 : i64, scratch_operands = 0 : i64, tpu.core_type = #tpu.core_type<tc>, window_params = [{transform_indices = @transform_0, window_bounds = array<i64: 2, 1024>}, {transform_indices = @transform_1, window_bounds = array<i64: 2, 1024>}]} {
    %c0 = arith.constant 0 : index
    %c0_0 = arith.constant 0 : index
    %0 = vector.load %arg1[%c0, %c0_0] : memref<2x1024xf32, #tpu.memory_space<vmem>>, vector<2x1024xf32>
    %cst = arith.constant -2.000000e+00 : f32
    %1 = vector.broadcast %cst : f32 to vector<2x1024xf32>
    %2 = arith.mulf %1, %0 : vector<2x1024xf32>
    %3 = arith.mulf %2, %0 : vector<2x1024xf32>
    %cst_1 = arith.constant 1.500000e+00 : f32
    %4 = vector.broadcast %cst_1 : f32 to vector<2x1024xf32>
    %5 = arith.addf %4, %3 : vector<2x1024xf32>
    %6 = arith.mulf %0, %5 : vector<2x1024xf32>
    %cst_2 = arith.constant 5.000000e-01 : f32
    %7 = vector.broadcast %cst_2 : f32 to vector<2x1024xf32>
    %8 = arith.addf %6, %7 : vector<2x1024xf32>
    %cst_3 = arith.constant -5.000000e-01 : f32
    %9 = vector.broadcast %cst_3 : f32 to vector<2x1024xf32>
    %10 = arith.cmpf ole, %0, %9 : vector<2x1024xf32>
    %cst_4 = arith.constant 5.000000e-01 : f32
    %11 = vector.broadcast %cst_4 : f32 to vector<2x1024xf32>
    %12 = arith.cmpf oge, %0, %11 : vector<2x1024xf32>
    %cst_5 = arith.constant 1.000000e+00 : f32
    %13 = vector.broadcast %cst_5 : f32 to vector<2x1024xf32>
    %14 = arith.select %12, %13, %8 : vector<2x1024xi1>, vector<2x1024xf32>
    %cst_6 = arith.constant 0.000000e+00 : f32
    %15 = vector.broadcast %cst_6 : f32 to vector<2x1024xf32>
    %16 = arith.select %10, %15, %14 : vector<2x1024xi1>, vector<2x1024xf32>
    %c0_7 = arith.constant 0 : index
    %c0_8 = arith.constant 0 : index
    %17 = vector.load %arg2[%c0_7, %c0_8] : memref<2x1024xf32, #tpu.memory_space<vmem>>, vector<2x1024xf32>
    tpu.vector_store %arg2[%c0_7, %c0_8], %16 {strides = array<i32>} : memref<2x1024xf32, #tpu.memory_space<vmem>>, vector<2x1024xf32>,
    return
  }
  func.func @transform_0(%arg0: i32) -> (i32, i32) {
    %c0_i32 = arith.constant 0 : i32
    %c0_i32_0 = arith.constant 0 : i32
    return %arg0, %c0_i32 : i32, i32
  }
  func.func @transform_1(%arg0: i32) -> (i32, i32) {
    %c0_i32 = arith.constant 0 : i32
    %c0_i32_0 = arith.constant 0 : i32
    return %arg0, %c0_i32 : i32, i32
  }
}

</mosaic_0001>

<llo_original>
// kernel: tpu_custom_call.1
$region0: #{tpu_custom_call.1}
  #allocation0 [shape = 'u32[]', space=smem, size = 0x4, offset = 0x4, fixed_abs, tag = 'smem constant byte address 0x4 - core index']
  #allocation1 [shape = 'u32[144,128]{1,0:T(1,128)}', space=vmem, size = 0x12000, scoped, tag = 'internal scratch']
  %s0 = inlined_call_operand.hbm [shape: f32[2,1024], index: 0, kind: input, shape index: {}]
  %s1 = inlined_call_operand.hbm [shape: f32[2,1024], index: 1, kind: output, shape index: {}]
  %s2 = sld [smem:[#allocation0]]
  $region18: #{tpu_custom_call.1} parent=0
    _
  %s4 = ssub.s32 1, %s2
  %s5 = scalar_select 0, %s4, %s2
  $region1: #{tpu_custom_call.1} parent=0
    #allocation2 [shape = 'u8[8192]{0}', space=vmem, size = 0x2000, scoped, tag = 'input window, operand 0, single buffered']
    #allocation3 [shape = 's32[1]{0}', space=sflag, size = 0x4, scoped, tag = 'scoped memory for tpu_custom_call.1']
    #allocation4 [shape = 's32[1]{0}', space=sflag, size = 0x4, scoped, tag = 'scoped memory for tpu_custom_call.1']
    #allocation5 [shape = 'u8[8192]{0}', space=vmem, size = 0x2000, scoped, tag = 'output window, operand 0, single buffered']
    %6 = vsyncpa [#allocation3], 0
    %7 = vsyncpa [#allocation4], 0
    // Predicated region
    $region2: #{tpu_custom_call.1} parent=1 // pred_check
      _
    $region3: #{tpu_custom_call.1} parent=1 // pred_check_branch
      %9 = sbr.rel (0) target = $region5
    $region4: #{tpu_custom_call.1} parent=1 // pred_region
      %s11 = ssub.s32 256, 256
      %12 = vsyncadd [#allocation3], %s11
      %s14 = sshll.u32 [#allocation2], 4
      %s15 = int_to_ptr.vmem [resolvable:$true] %s14
      %17 = dma.hbm_to_vmem [thread:$0]  %s0, 256, %s15, [#allocation3]
    $region5: #{tpu_custom_call.1} parent=1 // pred_fallthru
      _
    // Predicated region
    $region6: #{tpu_custom_call.1} parent=1 // pred_check
      _
    $region7: #{tpu_custom_call.1} parent=1 // pred_check_branch
      %19 = sbr.rel (0) target = $region9
    $region8: #{tpu_custom_call.1} parent=1 // pred_region
      %20 = dma.done [#allocation3], 256
    $region9: #{tpu_custom_call.1} parent=1 // pred_fallthru
      _
    %v21 = vld [vmem:[#allocation2] sm:$0xff]
    %v22 = vld [vmem:[#allocation2 + $0x8] sm:$0xff]
    %v23 = vmul.f32 %v21, -2.0
    %v24 = vmul.f32 %v22, -2.0
    %v25 = vmul.f32 %v23, %v21
    %v26 = vmul.f32 %v24, %v22
    %v27 = vadd.f32 %v25, 1.5
    %v28 = vadd.f32 %v26, 1.5
    %v29 = vmul.f32 %v21, %v27
    %v30 = vmul.f32 %v22, %v28
    %v31 = vadd.f32 %v29, 0.5
    %v32 = vadd.f32 %v30, 0.5
    %vm33 = vcmp.le.f32.partialorder %v21, -0.5
    %vm34 = vcmp.le.f32.partialorder %v22, -0.5
    %vm35 = vcmp.ge.f32.partialorder %v21, 0.5
    %vm36 = vcmp.ge.f32.partialorder %v22, 0.5
    %v37 = vsel %vm35, 1.0, %v31
    %v38 = vsel %vm36, 1.0, %v32
    %v39 = vsel %vm33, 0.0, %v37
    %v40 = vsel %vm34, 0.0, %v38
    %41 = vst [vmem:[#allocation5] sm:$0xff] %v39
    %42 = vst [vmem:[#allocation5 + $0x8] sm:$0xff] %v40
    // Predicated region
    $region10: #{tpu_custom_call.1} parent=1 // pred_check
      _
    $region11: #{tpu_custom_call.1} parent=1 // pred_check_branch
      %44 = sbr.rel (0) target = $region13
    $region12: #{tpu_custom_call.1} parent=1 // pred_region
      %s46 = ssub.s32 256, 256
      %47 = vsyncadd [#allocation4], %s46
      %s49 = sshll.u32 [#allocation5], 4
      %s50 = int_to_ptr.vmem [resolvable:$true] %s49
      %52 = dma.vmem_to_hbm [thread:$0]  %s50, 256, %s1, [#allocation4]
    $region13: #{tpu_custom_call.1} parent=1 // pred_fallthru
      _
    // Predicated region
    $region14: #{tpu_custom_call.1} parent=1 // pred_check
      _
    $region15: #{tpu_custom_call.1} parent=1 // pred_check_branch
      %54 = sbr.rel (0) target = $region17
    $region16: #{tpu_custom_call.1} parent=1 // pred_region
      %55 = dma.done [#allocation4], 256
    $region17: #{tpu_custom_call.1} parent=1 // pred_fallthru
      _
    %56 = vsyncpa [#allocation3], 1
    %57 = vsyncpa [#allocation4], 1

</llo_original>
